<compile_context>
chip_gen: v7x
topology: tpu7x:2x2x1
jax: 0.10.0
libtpu: 0.0.40
codegen_flags: <defaults>
</compile_context>

<pallas_src>
import jax
import jax.numpy as jnp
from jax.experimental import pallas as pl
from jax.experimental.pallas import tpu as pltpu


def _round_up(x, m):
    return ((x + m - 1) // m) * m


def _pick_tile(dim, want, align):
    """Pick (tile, padded_dim): tile is a multiple of `align`, tile divides
    padded_dim, and padding is avoided whenever the problem allows it."""
    want = max(align, (want // align) * align)
    dim_a = _round_up(dim, align)
    if dim_a <= want:
        return dim_a, dim_a
    # Prefer a tile in [want/2, want] that divides the aligned dim (no extra pad).
    t = want
    lo = max(align, want // 2)
    while t >= lo:
        if dim_a % t == 0:
            return t, dim_a
        t -= align
    # Fall back: pad up to a multiple of the requested tile.
    return want, _round_up(dim, want)


def _joint_kernel(enc_ref, pred_ref, w_ref, b_ref, o_ref, act_ref):
    # enc_ref : (1, tT, Dp)             pred_ref: (1, tU, Dp)
    # w_ref   : (Dp, tV) bf16           b_ref   : (1, tV) f32
    # o_ref   : (1, tT, tU, tV)         act_ref : (tT*tU, Dp) bf16 scratch
    tT = enc_ref.shape[1]
    tU = pred_ref.shape[1]

    # Fused broadcast-add + SiLU + bf16 cast, computed once per (b,t,u) tile
    # (v == 0) and reused for every V tile of the inner loop.
    @pl.when(pl.program_id(3) == 0)
    def _():
        # f32 elementwise path: correct on v5e (no bf16 VPU/EUP).
        # TODO(synk): on v6e/v7x a bf16 elementwise path would ~2x this phase.
        x = (enc_ref[0].astype(jnp.float32)[:, None, :]
             + pred_ref[0].astype(jnp.float32)[None, :, :])        # (tT,tU,Dp)
        # Single-transcendental SiLU: x*sigmoid(x) == x*(0.5*tanh(0.5*x)+0.5).
        act = x * (0.5 * jnp.tanh(0.5 * x) + 0.5)
        # tU % 8 == 0 and Dp % 128 == 0 -> layout-preserving (free) reshape.
        act_ref[...] = act.reshape(tT * tU, -1).astype(jnp.bfloat16)

    out = jnp.dot(act_ref[...], w_ref[...],
                  preferred_element_type=jnp.float32)               # MXU
    out = out + b_ref[...]                                          # f32 bias
    o_ref[0] = out.reshape(tT, tU, -1).astype(o_ref.dtype)


class JointNetworkPallas:
    """Pallas TPU forward pass of `JointNetwork`:
    nn.Linear(D, V) applied to silu(enc[:, :, None, :] + pred[:, None, :, :])."""

    def __init__(self, weight, bias, *, tile_t=64, tile_u=32, tile_v=256,
                 out_dtype=None, vmem_limit_bytes=40 * 1024 * 1024):
        V, D = weight.shape
        self.V, self.D = V, D
        self.Dp = _round_up(D, 128)
        self.tile_t, self.tile_u = tile_t, tile_u
        self.tV, self.Vp = _pick_tile(V, tile_v, 128)
        self.out_dtype = out_dtype
        self.vmem_limit_bytes = vmem_limit_bytes
        # Static model params: transpose to (D, V), cast to bf16 (native MXU
        # rate, f32 accumulation in-kernel), zero-pad once at init (not per call).
        self.w_t = jnp.pad(weight.T.astype(jnp.bfloat16),
                           ((0, self.Dp - D), (0, self.Vp - V)))
        self.b_p = jnp.pad(bias.astype(jnp.float32),
                           (0, self.Vp - V)).reshape(1, self.Vp)

    def __call__(self, enc_outs, pred_outs):
        B, T, D = enc_outs.shape
        Bp, U, Dq = pred_outs.shape
        assert D == self.D and Dq == self.D and Bp == B
        out_dtype = enc_outs.dtype if self.out_dtype is None else self.out_dtype

        Dp, tV, Vp = self.Dp, self.tV, self.Vp
        tT, Tp = _pick_tile(T, self.tile_t, 8)
        tU, Up = _pick_tile(U, self.tile_u, 8)   # tU % 8 == 0 -> free reshape

        # Zero-pad.  Padding D is numerically exact (padded weight rows are 0,
        # contribute nothing).  Padded T/U rows / V columns are computed
        # (cheap, < one tile) and sliced off below only if padding occurred.
        enc_p = jnp.pad(enc_outs, ((0, 0), (0, Tp - T), (0, Dp - D)))
        pred_p = jnp.pad(pred_outs, ((0, 0), (0, Up - U), (0, Dp - D)))

        grid = (B, Tp // tT, Up // tU, Vp // tV)

        out = pl.pallas_call(
            _joint_kernel,
            out_shape=jax.ShapeDtypeStruct((B, Tp, Up, Vp), out_dtype),
            grid_spec=pltpu.PrefetchScalarGridSpec(
                num_scalar_prefetch=0,
                grid=grid,
                in_specs=[
                    pl.BlockSpec((1, tT, Dp), lambda b, t, u, v: (b, t, 0)),
                    pl.BlockSpec((1, tU, Dp), lambda b, t, u, v: (b, u, 0)),
                    pl.BlockSpec((Dp, tV), lambda b, t, u, v: (0, v)),
                    pl.BlockSpec((1, tV), lambda b, t, u, v: (0, v)),
                ],
                out_specs=pl.BlockSpec((1, tT, tU, tV),
                                       lambda b, t, u, v: (b, t, u, v)),
                scratch_shapes=[pltpu.VMEM((tT * tU, Dp), jnp.bfloat16)],
            ),
            compiler_params=pltpu.CompilerParams(
                # v innermost + "arbitrary": it carries the activation scratch.
                # b/t/u "parallel" -> megacore sharding on v7x.
                dimension_semantics=("parallel", "parallel", "parallel",
                                     "arbitrary"),
                vmem_limit_bytes=self.vmem_limit_bytes,
            ),
        )(enc_p, pred_p, self.w_t, self.b_p)

        if (Tp, Up, Vp) != (T, U, self.V):
            out = out[:, :T, :U, :self.V]
        return out


def joint_network_ref(enc_outs, pred_outs, weight, bias):
    joint = enc_outs[:, :, None, :] + pred_outs[:, None, :, :]
    act = joint * jax.nn.sigmoid(joint)
    return jnp.einsum("btud,vd->btuv", act, weight) + bias


if __name__ == "__main__":
    key = jax.random.PRNGKey(0)
    k1, k2, k3, k4, k5, k6, k7, k8 = jax.random.split(key, 8)

    # ---- Test 1: small shapes, single-tile path -----------------------------
    B, T, U, D, V = 2, 24, 12, 32, 16
    enc = jax.random.normal(k1, (B, T, D), dtype=jnp.float32)
    pred = jax.random.normal(k2, (B, U, D), dtype=jnp.float32)
    weight = jax.random.normal(k3, (V, D), dtype=jnp.float32) * 0.1   # (V, D)
    bias = jax.random.normal(k4, (V,), dtype=jnp.float32) * 0.1

    joint = JointNetworkPallas(weight, bias)
    out = jax.block_until_ready(joint(enc, pred))
    ref = joint_network_ref(enc, pred, weight, bias)
    assert out.shape == (B, T, U, V)
    # bf16 matmul operands -> looser tolerance vs. f32 reference.
    assert jnp.allclose(out, ref, atol=2e-2, rtol=2e-2)

    # ---- Test 2: multi-tile path (T/U tiling, V-inner loop reusing the
    # activation scratch via pl.when(v == 0)), bf16 output --------------------
    B2, T2, U2, D2, V2 = 2, 16, 8, 32, 256
    enc2 = jax.random.normal(k5, (B2, T2, D2), dtype=jnp.float32)
    pred2 = jax.random.normal(k6, (B2, U2, D2), dtype=jnp.float32)
    weight2 = jax.random.normal(k7, (V2, D2), dtype=jnp.float32) * 0.1
    bias2 = jax.random.normal(k8, (V2,), dtype=jnp.float32) * 0.1

    joint2 = JointNetworkPallas(weight2, bias2, tile_t=8, tile_u=8,
                                tile_v=128, out_dtype=jnp.bfloat16)
    out2 = jax.block_until_ready(joint2(enc2, pred2))
    ref2 = joint_network_ref(enc2, pred2, weight2, bias2)
    assert out2.shape == (B2, T2, U2, V2)
    assert out2.dtype == jnp.bfloat16
    assert jnp.allclose(out2.astype(jnp.float32), ref2, atol=5e-2, rtol=5e-2)

    print("KERNEL_OK")
</pallas_src>

<mosaic_0001>
module attributes {stable_mosaic.version = 11 : i64} {
  func.func @_joint_kernel(%arg0: i32, %arg1: i32, %arg2: i32, %arg3: i32, %arg4: memref<1x24x128xf32, #tpu.memory_space<vmem>>, %arg5: memref<1x16x128xf32, #tpu.memory_space<vmem>>, %arg6: memref<128x128xbf16, #tpu.memory_space<vmem>>, %arg7: memref<1x128xf32, #tpu.memory_space<vmem>>, %arg8: memref<1x24x16x128xf32, #tpu.memory_space<vmem>>, %arg9: memref<384x128xbf16, #tpu.memory_space<vmem>>) attributes {dimension_semantics = [#tpu.dimension_semantics<parallel>, #tpu.dimension_semantics<parallel>, #tpu.dimension_semantics<parallel>, #tpu.dimension_semantics<arbitrary>], iteration_bounds = array<i64: 2, 1, 1, 1>, scalar_prefetch = 0 : i64, scratch_operands = 1 : i64, tpu.core_type = #tpu.core_type<tc>, window_params = [{transform_indices = @transform_0, window_bounds = array<i64: 1, 24, 128>}, {transform_indices = @transform_1, window_bounds = array<i64: 1, 16, 128>}, {transform_indices = @transform_2, window_bounds = array<i64: 128, 128>}, {transform_indices = @transform_3, window_bounds = array<i64: 1, 128>}, {transform_indices = @transform_4, window_bounds = array<i64: 1, 24, 16, 128>}]} {
    %c0_i32 = arith.constant 0 : i32
    %0 = arith.cmpi eq, %arg3, %c0_i32 : i32
    %1 = arith.extui %0 : i1 to i32
    %c0_i32_0 = arith.constant 0 : i32
    %2 = arith.cmpi ne, %1, %c0_i32_0 : i32
    scf.if %2 {
      %c0_10 = arith.constant 0 : index
      %c0_11 = arith.constant 0 : index
      %c0_12 = arith.constant 0 : index
      %13 = vector.load %arg4[%c0_10, %c0_11, %c0_12] : memref<1x24x128xf32, #tpu.memory_space<vmem>>, vector<1x24x128xf32>
      %14 = vector.shape_cast %13 : vector<1x24x128xf32> to vector<24x128xf32>
      %15 = vector.shape_cast %14 : vector<24x128xf32> to vector<24x1x128xf32>
      %c0_13 = arith.constant 0 : index
      %c0_14 = arith.constant 0 : index
      %c0_15 = arith.constant 0 : index
      %16 = vector.load %arg5[%c0_13, %c0_14, %c0_15] : memref<1x16x128xf32, #tpu.memory_space<vmem>>, vector<1x16x128xf32>
      %17 = vector.shape_cast %16 : vector<1x16x128xf32> to vector<16x128xf32>
      %18 = vector.shape_cast %17 : vector<16x128xf32> to vector<1x16x128xf32>
      %19 = vector.broadcast %15 : vector<24x1x128xf32> to vector<24x16x128xf32>
      %20 = vector.broadcast %18 : vector<1x16x128xf32> to vector<24x16x128xf32>
      %21 = arith.addf %19, %20 : vector<24x16x128xf32>
      %cst_16 = arith.constant 5.000000e-01 : f32
      %22 = vector.broadcast %cst_16 : f32 to vector<24x16x128xf32>
      %23 = arith.mulf %22, %21 : vector<24x16x128xf32>
      %24 = math.tanh %23 : vector<24x16x128xf32>
      %cst_17 = arith.constant 5.000000e-01 : f32
      %25 = vector.broadcast %cst_17 : f32 to vector<24x16x128xf32>
      %26 = arith.mulf %25, %24 : vector<24x16x128xf32>
      %cst_18 = arith.constant 5.000000e-01 : f32
      %27 = vector.broadcast %cst_18 : f32 to vector<24x16x128xf32>
      %28 = arith.addf %26, %27 : vector<24x16x128xf32>
      %29 = arith.mulf %21, %28 : vector<24x16x128xf32>
      %30 = vector.shape_cast %29 : vector<24x16x128xf32> to vector<384x128xf32>
      %31 = arith.truncf %30 : vector<384x128xf32> to vector<384x128xbf16>
      %c0_19 = arith.constant 0 : index
      %c0_20 = arith.constant 0 : index
      %32 = vector.load %arg9[%c0_19, %c0_20] : memref<384x128xbf16, #tpu.memory_space<vmem>>, vector<384x128xbf16>
      tpu.vector_store %arg9[%c0_19, %c0_20], %31 {strides = array<i32>} : memref<384x128xbf16, #tpu.memory_space<vmem>>, vector<384x128xbf16>,
    } else {
    }
    %c0 = arith.constant 0 : index
    %c0_1 = arith.constant 0 : index
    %3 = vector.load %arg9[%c0, %c0_1] : memref<384x128xbf16, #tpu.memory_space<vmem>>, vector<384x128xbf16>
    %c0_2 = arith.constant 0 : index
    %c0_3 = arith.constant 0 : index
    %4 = vector.load %arg6[%c0_2, %c0_3] : memref<128x128xbf16, #tpu.memory_space<vmem>>, vector<128x128xbf16>
    %cst = arith.constant dense<0.000000e+00> : vector<384x128xf32>
    %5 = tpu.matmul %3, %4, %cst {dimension_numbers = #tpu.dot_dimension_numbers<[1], [0], [0], [1], [0, 0, 1, 1], [], []>} : vector<384x128xbf16>, vector<128x128xbf16>, vector<384x128xf32> -> vector<384x128xf32>
    %c0_4 = arith.constant 0 : index
    %c0_5 = arith.constant 0 : index
    %6 = vector.load %arg7[%c0_4, %c0_5] : memref<1x128xf32, #tpu.memory_space<vmem>>, vector<1x128xf32>
    %7 = vector.broadcast %6 : vector<1x128xf32> to vector<384x128xf32>
    %8 = arith.addf %5, %7 : vector<384x128xf32>
    %9 = vector.shape_cast %8 : vector<384x128xf32> to vector<24x16x128xf32>
    %c0_6 = arith.constant 0 : index
    %c0_7 = arith.constant 0 : index
    %c0_8 = arith.constant 0 : index
    %c0_9 = arith.constant 0 : index
    %10 = vector.load %arg8[%c0_6, %c0_7, %c0_8, %c0_9] : memref<1x24x16x128xf32, #tpu.memory_space<vmem>>, vector<1x24x16x128xf32>
    %11 = vector.shape_cast %10 : vector<1x24x16x128xf32> to vector<24x16x128xf32>
    %12 = vector.shape_cast %9 : vector<24x16x128xf32> to vector<1x24x16x128xf32>
    tpu.vector_store %arg8[%c0_6, %c0_7, %c0_8, %c0_9], %12 {strides = array<i32>} : memref<1x24x16x128xf32, #tpu.memory_space<vmem>>, vector<1x24x16x128xf32>,
    return
  }
  func.func @transform_0(%arg0: i32, %arg1: i32, %arg2: i32, %arg3: i32) -> (i32, i32, i32) {
    %c0_i32 = arith.constant 0 : i32
    %c0_i32_0 = arith.constant 0 : i32
    return %arg0, %arg1, %c0_i32 : i32, i32, i32
  }
  func.func @transform_1(%arg0: i32, %arg1: i32, %arg2: i32, %arg3: i32) -> (i32, i32, i32) {
    %c0_i32 = arith.constant 0 : i32
    %c0_i32_0 = arith.constant 0 : i32
    return %arg0, %arg2, %c0_i32 : i32, i32, i32
  }
  func.func @transform_2(%arg0: i32, %arg1: i32, %arg2: i32, %arg3: i32) -> (i32, i32) {
    %c0_i32 = arith.constant 0 : i32
    %c0_i32_0 = arith.constant 0 : i32
    return %c0_i32, %arg3 : i32, i32
  }
  func.func @transform_3(%arg0: i32, %arg1: i32, %arg2: i32, %arg3: i32) -> (i32, i32) {
    %c0_i32 = arith.constant 0 : i32
    %c0_i32_0 = arith.constant 0 : i32
    return %c0_i32, %arg3 : i32, i32
  }
  func.func @transform_4(%arg0: i32, %arg1: i32, %arg2: i32, %arg3: i32) -> (i32, i32, i32, i32) {
    %c0_i32 = arith.constant 0 : i32
    return %arg0, %arg1, %arg2, %arg3 : i32, i32, i32, i32
  }
}

</mosaic_0001>

<llo_original>
// kernel: tpu_custom_call.1
$region0: #{tpu_custom_call.1}
  #allocation0 [shape = 'u32[]', space=smem, size = 0x4, offset = 0x4, fixed_abs, tag = 'smem constant byte address 0x4 - core index']
  #allocation1 [shape = 'u32[144,128]{1,0:T(1,128)}', space=vmem, size = 0x12000, scoped, tag = 'internal scratch']
  #allocation2 [shape = 'bf16[384,128]{1,0:T(16,128)(2,1)}', space=vmem, size = 0x18000, scoped, tag = 'scratch operand']
  %s0 = inlined_call_operand.hbm [shape: f32[2,24,128], index: 0, kind: input, shape index: {}]
  %s1 = inlined_call_operand.hbm [shape: f32[2,16,128], index: 1, kind: input, shape index: {}]
  %s2 = inlined_call_operand.hbm [shape: bf16[128,128], index: 2, kind: input, shape index: {}]
  %s3 = inlined_call_operand.vmem [shape: f32[1,128], index: 3, kind: input, shape index: {}]
  %s4 = inlined_call_operand.hbm [shape: f32[2,24,16,128], index: 4, kind: output, shape index: {}]
  %s5 = sld [smem:[#allocation0]]
  $region65: #{tpu_custom_call.1} parent=0
    _
  %s7 = ssub.s32 1, %s5
  %s8 = scalar_select 0, %s7, %s5
  $region1: #{tpu_custom_call.1} parent=0
    #allocation3 [shape = 'u8[24576]{0}', space=vmem, size = 0x6000, scoped, tag = 'input window, operand 0']
    #allocation4 [shape = 's32[2]{0}', space=sflag, size = 0x8, scoped, tag = 'scoped memory for tpu_custom_call.1']
    #allocation5 [shape = 's32[2]{0}', space=sflag, size = 0x8, scoped, tag = 'scoped memory for tpu_custom_call.1']
    #allocation6 [shape = 'u8[16384]{0}', space=vmem, size = 0x4000, scoped, tag = 'input window, operand 1']
    #allocation7 [shape = 's32[2]{0}', space=sflag, size = 0x8, scoped, tag = 'scoped memory for tpu_custom_call.1']
    #allocation8 [shape = 'u8[32768]{0}', space=vmem, size = 0x8000, scoped, tag = 'input window, operand 2, single buffered']
    #allocation9 [shape = 'u8[393216]{0}', space=vmem, size = 0x60000, scoped, tag = 'output window, operand 0']
    %9 = vsyncpa [#allocation4], 0
    %s10 = scalar_lea.sflag [#allocation4], 1
    %11 = vsyncpa %s10, 0
    %12 = vsyncpa [#allocation7], 0
    %s13 = scalar_lea.sflag [#allocation7], 1
    %14 = vsyncpa %s13, 0
    %15 = vsyncpa [#allocation5], 0
    %s16 = scalar_lea.sflag [#allocation5], 1
    %17 = vsyncpa %s16, 0
    loop: start=0, step=1, limit=4
    $region2: #{tpu_custom_call.1} parent=1 // loop_pre_header
      _
    $region3: #{tpu_custom_call.1} parent=1 // loop_header
      %s19 = sphi 0, %s23
      %p20 = scmp.ge.s32.totalorder %s19, 4
      %s26 = sphi 0, %s52
      %s27 = sphi 0, %s48
      %s28 = sphi 0, %s44
      %s29 = sphi 0, %s40
      %s30 = sphi 0, %s26
      %s31 = sphi 0, %s27
      %s32 = sphi 0, %s28
      %s33 = sphi 0, %s29
      %s34 = sphi 0, %s30
      %s35 = sphi 0, %s31
      %s36 = sphi 0, %s32
      %s37 = sphi 0, %s33
      %s57 = sphi 0, %s59
      %s60 = sphi 0, %s57
      %s61 = sphi 0, %s60
      %s77 = sphi 0, %s61
      %s85 = sphi 0, %s87
      %s88 = sphi 0, %s85
      %s89 = sphi 0, %s88
      %s105 = sphi 0, %s89
      %s111 = sphi 0, %s113
      %s114 = sphi 0, %s111
      %s115 = sphi 0, %s114
      %s131 = sphi 0, %s115
      %s137 = sphi 0, %s139
      %s140 = sphi 0, %s137
      %s141 = sphi 0, %s140
      %s157 = sphi 0, %s141
      %s169 = sphi 0, %s171
      %s172 = sphi 0, %s169
      %s173 = sphi 0, %s172
      %s189 = sphi 0, %s173
    $region4: #{tpu_custom_call.1} parent=1 // loop_header_branch
      %22 = sbr.rel (%p20) target = $region8
    $region5: #{tpu_custom_call.1} parent=1 // loop_body
      %s24 = ssub.s32 %s19, 1
      %s25 = ssub.s32 %s19, 2
      %s38 = sadd.s32 1, %s29
      %p39 = scmp.ge.s32.totalorder %s38, 1
      %s40 = scalar_select %p39, 0, %s38
      %s41 = sadd.s32 1, %s28
      %s42 = scalar_select %p39, %s41, %s28
      %p43 = scmp.ge.s32.totalorder %s42, 1
      %s44 = scalar_select %p43, 0, %s42
      %s45 = sadd.s32 1, %s27
      %s46 = scalar_select %p43, %s45, %s27
      %p47 = scmp.ge.s32.totalorder %s46, 1
      %s48 = scalar_select %p47, 0, %s46
      %s49 = sadd.s32 1, %s26
      %s50 = scalar_select %p47, %s49, %s26
      %p51 = scmp.ge.s32.totalorder %s50, 2
      %s52 = scalar_select %p51, 0, %s50
      %s53 = ssub.s32 %s26, %s52
      %s54 = ssub.s32 %s27, %s48
      %s55 = sor.u32 %s53, %s54
      %p56 = scmp.eq.s32.totalorder %s55, 0
      %s58 = sadd.s32 %s57, 1
      %s59 = scalar_select %p56, %s57, %s58
      %p62 = pneg %p56
      %p63 = scmp.eq.s32.totalorder %s19, 1
      %p64 = por %p62, %p63
      %p65 = scmp.ne.s32.totalorder %s57, %s60
      %p66 = scmp.eq.s32.totalorder %s19, 0
      %p67 = por %p65, %p66
      %p68 = scmp.ne.s32.totalorder %s57, %s60
      %p69 = scmp.eq.s32.totalorder %s24, 1
      %p70 = por %p68, %p69
      %p71 = scmp.ne.s32.totalorder %s60, %s61
      %p72 = scmp.eq.s32.totalorder %s24, 0
      %p73 = por %p71, %p72
      %p74 = scmp.ne.s32.totalorder %s60, %s61
      %p75 = scmp.eq.s32.totalorder %s25, 1
      %p76 = por %p74, %p75
      %p78 = scmp.ne.s32.totalorder %s61, %s77
      %p79 = scmp.eq.s32.totalorder %s25, 0
      %p80 = por %p78, %p79
      %s81 = ssub.s32 %s26, %s52
      %s82 = ssub.s32 %s28, %s44
      %s83 = sor.u32 %s81, %s82
      %p84 = scmp.eq.s32.totalorder %s83, 0
      %s86 = sadd.s32 %s85, 1
      %s87 = scalar_select %p84, %s85, %s86
      %p90 = pneg %p84
      %p91 = scmp.eq.s32.totalorder %s19, 1
      %p92 = por %p90, %p91
      %p93 = scmp.ne.s32.totalorder %s85, %s88
      %p94 = scmp.eq.s32.totalorder %s19, 0
      %p95 = por %p93, %p94
      %p96 = scmp.ne.s32.totalorder %s85, %s88
      %p97 = scmp.eq.s32.totalorder %s24, 1
      %p98 = por %p96, %p97
      %p99 = scmp.ne.s32.totalorder %s88, %s89
      %p100 = scmp.eq.s32.totalorder %s24, 0
      %p101 = por %p99, %p100
      %p102 = scmp.ne.s32.totalorder %s88, %s89
      %p103 = scmp.eq.s32.totalorder %s25, 1
      %p104 = por %p102, %p103
      %p106 = scmp.ne.s32.totalorder %s89, %s105
      %p107 = scmp.eq.s32.totalorder %s25, 0
      %p108 = por %p106, %p107
      %s109 = ssub.s32 %s29, %s40
      %p110 = scmp.eq.s32.totalorder %s109, 0
      %s112 = sadd.s32 %s111, 1
      %s113 = scalar_select %p110, %s111, %s112
      %p116 = pneg %p110
      %p117 = scmp.eq.s32.totalorder %s19, 1
      %p118 = por %p116, %p117
      %p119 = scmp.ne.s32.totalorder %s111, %s114
      %p120 = scmp.eq.s32.totalorder %s19, 0
      %p121 = por %p119, %p120
      %p122 = scmp.ne.s32.totalorder %s111, %s114
      %p123 = scmp.eq.s32.totalorder %s24, 1
      %p124 = por %p122, %p123
      %p125 = scmp.ne.s32.totalorder %s114, %s115
      %p126 = scmp.eq.s32.totalorder %s24, 0
      %p127 = por %p125, %p126
      %p128 = scmp.ne.s32.totalorder %s114, %s115
      %p129 = scmp.eq.s32.totalorder %s25, 1
      %p130 = por %p128, %p129
      %p132 = scmp.ne.s32.totalorder %s115, %s131
      %p133 = scmp.eq.s32.totalorder %s25, 0
      %p134 = por %p132, %p133
      %s135 = ssub.s32 %s29, %s40
      %p136 = scmp.eq.s32.totalorder %s135, 0
      %s138 = sadd.s32 %s137, 1
      %s139 = scalar_select %p136, %s137, %s138
      %p142 = pneg %p136
      %p143 = scmp.eq.s32.totalorder %s19, 1
      %p144 = por %p142, %p143
      %p145 = scmp.ne.s32.totalorder %s137, %s140
      %p146 = scmp.eq.s32.totalorder %s19, 0
      %p147 = por %p145, %p146
      %p148 = scmp.ne.s32.totalorder %s137, %s140
      %p149 = scmp.eq.s32.totalorder %s24, 1
      %p150 = por %p148, %p149
      %p151 = scmp.ne.s32.totalorder %s140, %s141
      %p152 = scmp.eq.s32.totalorder %s24, 0
      %p153 = por %p151, %p152
      %p154 = scmp.ne.s32.totalorder %s140, %s141
      %p155 = scmp.eq.s32.totalorder %s25, 1
      %p156 = por %p154, %p155
      %p158 = scmp.ne.s32.totalorder %s141, %s157
      %p159 = scmp.eq.s32.totalorder %s25, 0
      %p160 = por %p158, %p159
      %s161 = ssub.s32 %s26, %s52
      %s162 = ssub.s32 %s27, %s48
      %s163 = sor.u32 %s161, %s162
      %s164 = ssub.s32 %s28, %s44
      %s165 = sor.u32 %s163, %s164
      %s166 = ssub.s32 %s29, %s40
      %s167 = sor.u32 %s165, %s166
      %p168 = scmp.eq.s32.totalorder %s167, 0
      %s170 = sadd.s32 %s169, 1
      %s171 = scalar_select %p168, %s169, %s170
      %p174 = pneg %p168
      %p175 = scmp.eq.s32.totalorder %s19, 1
      %p176 = por %p174, %p175
      %p177 = scmp.ne.s32.totalorder %s169, %s172
      %p178 = scmp.eq.s32.totalorder %s19, 0
      %p179 = por %p177, %p178
      %p180 = scmp.ne.s32.totalorder %s169, %s172
      %p181 = scmp.eq.s32.totalorder %s24, 1
      %p182 = por %p180, %p181
      %p183 = scmp.ne.s32.totalorder %s172, %s173
      %p184 = scmp.eq.s32.totalorder %s24, 0
      %p185 = por %p183, %p184
      %p186 = scmp.ne.s32.totalorder %s172, %s173
      %p187 = scmp.eq.s32.totalorder %s25, 1
      %p188 = por %p186, %p187
      %p190 = scmp.ne.s32.totalorder %s173, %s189
      %p191 = scmp.eq.s32.totalorder %s25, 0
      %p192 = por %p190, %p191
      %p193 = scmp.le.s32.totalorder 1, %s19
      %p194 = scmp.lt.s32.totalorder %s19, 3
      %p195 = pnand %p193, %p194
      %p196 = pneg %p195
      // Predicated region
      $region9: #{tpu_custom_call.1} parent=5 // pred_check
        _
      $region10: #{tpu_custom_call.1} parent=5 // pred_check_branch
        %198 = sbr.rel (%p195) target = $region12
      $region11: #{tpu_custom_call.1} parent=5 // pred_region
        %s199 = ssub.s32 %s19, 1
        // Predicated region
        $region13: #{tpu_custom_call.1} parent=11 // pred_check
          %p200 = pneg %p127
        $region14: #{tpu_custom_call.1} parent=11 // pred_check_branch
          %202 = sbr.rel (%p200) target = $region16
        $region15: #{tpu_custom_call.1} parent=11 // pred_region
          %s204 = ssub.s32 1024, 1024
          %205 = vsyncadd [#allocation7], %s204
          %s206 = smul.addr %s33, 64
          %s207 = scalar_lea.hbm %s2, %s206
          %s208 = sshll.u32 [#allocation8], 4
          %s209 = int_to_ptr.vmem [resolvable:$true] %s208
          %214 = dma.hbm_to_vmem [thread:$0]  %s207, 1024, %s209, [#allocation7], 64, 64, 4
        $region16: #{tpu_custom_call.1} parent=11 // pred_fallthru
          _
        // Predicated region
        $region17: #{tpu_custom_call.1} parent=11 // pred_check
          %p215 = pneg %p153
        $region18: #{tpu_custom_call.1} parent=11 // pred_check_branch
          %217 = sbr.rel (%p215) target = $region20
        $region19: #{tpu_custom_call.1} parent=11 // pred_region
          %p218 = scmp.lt.s32.totalorder %s33, 0
          %s219 = scalar_select %p218, %s33, 0
          %s220 = scalar_lea.vmem %s3, %s219
        $region20: #{tpu_custom_call.1} parent=11 // pred_fallthru
          _
      $region12: #{tpu_custom_call.1} parent=5 // pred_fallthru
        _
      %p221 = scmp.lt.s32.totalorder %s19, 2
      // Predicated region
      $region21: #{tpu_custom_call.1} parent=5 // pred_check
        %p222 = pneg %p221
      $region22: #{tpu_custom_call.1} parent=5 // pred_check_branch
        %224 = sbr.rel (%p222) target = $region24
      $region23: #{tpu_custom_call.1} parent=5 // pred_region
        // Predicated region
        $region25: #{tpu_custom_call.1} parent=23 // pred_check
          %p225 = pneg %p67
        $region26: #{tpu_custom_call.1} parent=23 // pred_check_branch
          %227 = sbr.rel (%p225) target = $region28
        $region27: #{tpu_custom_call.1} parent=23 // pred_region
          %s228 = sand.u32 %s57, 1
          %s229 = scalar_lea.sflag [#allocation4], %s228
          %s230 = sand.u32 %s57, 1
          %s231 = smul.addr %s230, 24
          %s232 = scalar_lea.vmem [#allocation3], %s231
          %s233 = smul.u32 3, %s27
          %s235 = ssub.s32 384, 384
          %236 = vsyncadd %s229, %s235
          %s237 = smul.addr %s26, 3
          %s238 = sadd.s32 %s233, %s237
          %s239 = smul.addr %s238, 128
          %s240 = scalar_lea.hbm %s0, %s239
          %s241 = sshll.u32 %s232, 4
          %s242 = int_to_ptr.vmem [resolvable:$true] %s241
          %247 = dma.hbm_to_vmem [thread:$0]  %s240, 384, %s242, %s229, 128, 128, 8
        $region28: #{tpu_custom_call.1} parent=23 // pred_fallthru
          _
        // Predicated region
        $region29: #{tpu_custom_call.1} parent=23 // pred_check
          %p248 = pneg %p95
        $region30: #{tpu_custom_call.1} parent=23 // pred_check_branch
          %250 = sbr.rel (%p248) target = $region32
        $region31: #{tpu_custom_call.1} parent=23 // pred_region
          %s251 = sand.u32 %s19, 1
          %s252 = scalar_lea.sflag [#allocation7], %s251
          %s253 = sand.u32 %s85, 1
          %s254 = smul.addr %s253, 16
          %s255 = scalar_lea.vmem [#allocation6], %s254
          %s256 = smul.u32 2, %s28
          %s258 = ssub.s32 256, 256
          %259 = vsyncadd %s252, %s258
          %s260 = smul.addr %s26, 2
          %s261 = sadd.s32 %s256, %s260
          %s262 = smul.addr %s261, 128
          %s263 = scalar_lea.hbm %s1, %s262
          %s264 = sshll.u32 %s255, 4
          %s265 = int_to_ptr.vmem [resolvable:$true] %s264
          %270 = dma.hbm_to_vmem [thread:$0]  %s263, 256, %s265, %s252, 128, 128, 8
        $region32: #{tpu_custom_call.1} parent=23 // pred_fallthru
          _
      $region24: #{tpu_custom_call.1} parent=5 // pred_fallthru
        _
      %p271 = scmp.le.s32.totalorder 1, %s19
      %p272 = scmp.lt.s32.totalorder %s19, 3
      %p273 = pnand %p271, %p272
      %p274 = pneg %p273
      // Predicated region
      $region33: #{tpu_custom_call.1} parent=5 // pred_check
        _
      $region34: #{tpu_custom_call.1} parent=5 // pred_check_branch
        %276 = sbr.rel (%p273) target = $region36
      $region35: #{tpu_custom_call.1} parent=5 // pred_region
        %s277 = ssub.s32 %s19, 1
        %s278 = sand.u32 %s60, 1
        %s279 = scalar_lea.sflag [#allocation4], %s278
        %s280 = sand.u32 %s60, 1
        %s281 = smul.addr %s280, 24
        %s282 = scalar_lea.vmem [#allocation3], %s281
        // Predicated region
        $region37: #{tpu_custom_call.1} parent=35 // pred_check
          %p283 = pneg %p73
        $region38: #{tpu_custom_call.1} parent=35 // pred_check_branch
          %285 = sbr.rel (%p283) target = $region40
        $region39: #{tpu_custom_call.1} parent=35 // pred_region
          %286 = dma.done %s279, 384
        $region40: #{tpu_custom_call.1} parent=35 // pred_fallthru
          _
        %s287 = sand.u32 %s24, 1
        %s288 = scalar_lea.sflag [#allocation7], %s287
        %s289 = sand.u32 %s88, 1
        %s290 = smul.addr %s289, 16
        %s291 = scalar_lea.vmem [#allocation6], %s290
        // Predicated region
        $region41: #{tpu_custom_call.1} parent=35 // pred_check
          %p292 = pneg %p101
        $region42: #{tpu_custom_call.1} parent=35 // pred_check_branch
          %294 = sbr.rel (%p292) target = $region44
        $region43: #{tpu_custom_call.1} parent=35 // pred_region
          %295 = dma.done %s288, 256
        $region44: #{tpu_custom_call.1} parent=35 // pred_fallthru
          _
        // Predicated region
        $region45: #{tpu_custom_call.1} parent=35 // pred_check
          %p296 = pneg %p127
        $region46: #{tpu_custom_call.1} parent=35 // pred_check_branch
          %298 = sbr.rel (%p296) target = $region48
        $region47: #{tpu_custom_call.1} parent=35 // pred_region
          %299 = dma.done [#allocation7], 1024
        $region48: #{tpu_custom_call.1} parent=35 // pred_fallthru
          _
        %s300 = sand.u32 %s60, 1
        %s301 = scalar_lea.sflag [#allocation4], %s300
        %s302 = sand.u32 %s60, 1
        %s303 = smul.addr %s302, 24
        %s304 = scalar_lea.vmem [#allocation3], %s303
        %p305 = pneg %p73
        %p306 = pneg %p70
        %s307 = sand.u32 %s24, 1
        %s308 = scalar_lea.sflag [#allocation7], %s307
        %s309 = sand.u32 %s88, 1
        %s310 = smul.addr %s309, 16
        %s311 = scalar_lea.vmem [#allocation6], %s310
        %p312 = pneg %p101
        %p313 = pneg %p98
        %p314 = pneg %p127
        %p315 = pneg %p124
        %p316 = scmp.lt.s32.totalorder %s33, 0
        %s317 = scalar_select %p316, %s33, 0
        %s318 = scalar_lea.vmem %s3, %s317
        %p319 = pneg %p153
        %p320 = pneg %p150
        %p321 = pneg %p185
        %p322 = pneg %p182
        %s323 = sand.u32 %s172, 1
        %s324 = scalar_lea.sflag [#allocation5], %s323
        %s325 = sand.u32 %s172, 1
        %s326 = smul.addr %s325, 384
        %s327 = scalar_lea.vmem [#allocation9], %s326
        %s328 = smul.u32 3, %s31
        %s329 = smul.u32 2, %s32
        %p330 = scmp.lt.s32.totalorder %s33, 0
        %s331 = scalar_select %p330, %s33, 0
        %s332 = scalar_lea.vmem %s3, %s331
        %s333 = smul.u32 24, %s31
        %s334 = smul.u32 2, %s32
        %p336 = scmp.eq.s32.totalorder %s33, 0
        // Predicated region
        $region49: #{tpu_custom_call.1} parent=35 // pred_check
          %p337 = pneg %p336
        $region50: #{tpu_custom_call.1} parent=35 // pred_check_branch
          %339 = sbr.rel (%p337) target = $region52
        $region51: #{tpu_custom_call.1} parent=35 // pred_region
          %v340 = vld [vmem:[%s282] sm:$0xff]
          %v341 = vld [vmem:[%s282 + $0x8] sm:$0xff]
          %v342 = vld [vmem:[%s282 + $0x10] sm:$0xff]
          %v346 = vcombine.high %v340, %v340
          %v348 = vunpack.c.l.s4 1966171168
          %v349 = vunpack.c.0.s8 %v348
          %v350 = vlaneseq
          %v351 = vshrl.u32 %v350, 7
          %v352 = vsub.s32 %v349, %v351
          %v353 = vrot.slane %v340, %v352
          %v355 = vunpack.c.l.s4 1966171168
          %v356 = vunpack.c.0.s8 %v355
          %v357 = vlaneseq
          %v358 = vshrl.u32 %v357, 7
          %v359 = vsub.s32 %v356, %v358
          %v360 = vrot.slane %v346, %v359
          %v361 = vcombine.high %v353, %v353
          %v362 = vcombine.high %v360, %v360
          %v364 = vunpack.c.l.s4 1966171168
          %v365 = vunpack.c.0.s8 %v364
          %v366 = vlaneseq
          %v367 = vshrl.u32 %v366, 7
          %v368 = vsub.s32 %v365, %v367
          %v369 = vrot.slane %v353, %v368
          %v371 = vunpack.c.l.s4 1966171168
          %v372 = vunpack.c.0.s8 %v371
          %v373 = vlaneseq
          %v374 = vshrl.u32 %v373, 7
          %v375 = vsub.s32 %v372, %v374
          %v376 = vrot.slane %v360, %v375
          %v378 = vunpack.c.l.s4 1966171168
          %v379 = vunpack.c.0.s8 %v378
          %v380 = vlaneseq
          %v381 = vshrl.u32 %v380, 7
          %v382 = vsub.s32 %v379, %v381
          %v383 = vrot.slane %v361, %v382
          %v385 = vunpack.c.l.s4 1966171168
          %v386 = vunpack.c.0.s8 %v385
          %v387 = vlaneseq
          %v388 = vshrl.u32 %v387, 7
          %v389 = vsub.s32 %v386, %v388
          %v390 = vrot.slane %v362, %v389
          %v391 = vcombine.high %v369, %v369
          %v392 = vcombine.high %v376, %v376
          %v393 = vcombine.high %v383, %v383
          %v394 = vcombine.high %v390, %v390
          %v395 = vcombine.high %v341, %v341
          %v397 = vunpack.c.l.s4 1966171168
          %v398 = vunpack.c.0.s8 %v397
          %v399 = vlaneseq
          %v400 = vshrl.u32 %v399, 7
          %v401 = vsub.s32 %v398, %v400
          %v402 = vrot.slane %v341, %v401
          %v404 = vunpack.c.l.s4 1966171168
          %v405 = vunpack.c.0.s8 %v404
          %v406 = vlaneseq
          %v407 = vshrl.u32 %v406, 7
          %v408 = vsub.s32 %v405, %v407
          %v409 = vrot.slane %v395, %v408
          %v410 = vcombine.high %v402, %v402
          %v411 = vcombine.high %v409, %v409
          %v413 = vunpack.c.l.s4 1966171168
          %v414 = vunpack.c.0.s8 %v413
          %v415 = vlaneseq
          %v416 = vshrl.u32 %v415, 7
          %v417 = vsub.s32 %v414, %v416
          %v418 = vrot.slane %v402, %v417
          %v420 = vunpack.c.l.s4 1966171168
          %v421 = vunpack.c.0.s8 %v420
          %v422 = vlaneseq
          %v423 = vshrl.u32 %v422, 7
          %v424 = vsub.s32 %v421, %v423
          %v425 = vrot.slane %v409, %v424
          %v427 = vunpack.c.l.s4 1966171168
          %v428 = vunpack.c.0.s8 %v427
          %v429 = vlaneseq
          %v430 = vshrl.u32 %v429, 7
          %v431 = vsub.s32 %v428, %v430
          %v432 = vrot.slane %v410, %v431
          %v434 = vunpack.c.l.s4 1966171168
          %v435 = vunpack.c.0.s8 %v434
          %v436 = vlaneseq
          %v437 = vshrl.u32 %v436, 7
          %v438 = vsub.s32 %v435, %v437
          %v439 = vrot.slane %v411, %v438
          %v440 = vcombine.high %v418, %v418
          %v441 = vcombine.high %v425, %v425
          %v442 = vcombine.high %v432, %v432
          %v443 = vcombine.high %v439, %v439
          %v444 = vcombine.high %v342, %v342
          %v446 = vunpack.c.l.s4 1966171168
          %v447 = vunpack.c.0.s8 %v446
          %v448 = vlaneseq
          %v449 = vshrl.u32 %v448, 7
          %v450 = vsub.s32 %v447, %v449
          %v451 = vrot.slane %v342, %v450
          %v453 = vunpack.c.l.s4 1966171168
          %v454 = vunpack.c.0.s8 %v453
          %v455 = vlaneseq
          %v456 = vshrl.u32 %v455, 7
          %v457 = vsub.s32 %v454, %v456
          %v458 = vrot.slane %v444, %v457
          %v459 = vcombine.high %v451, %v451
          %v460 = vcombine.high %v458, %v458
          %v462 = vunpack.c.l.s4 1966171168
          %v463 = vunpack.c.0.s8 %v462
          %v464 = vlaneseq
          %v465 = vshrl.u32 %v464, 7
          %v466 = vsub.s32 %v463, %v465
          %v467 = vrot.slane %v451, %v466
          %v469 = vunpack.c.l.s4 1966171168
          %v470 = vunpack.c.0.s8 %v469
          %v471 = vlaneseq
          %v472 = vshrl.u32 %v471, 7
          %v473 = vsub.s32 %v470, %v472
          %v474 = vrot.slane %v458, %v473
          %v476 = vunpack.c.l.s4 1966171168
          %v477 = vunpack.c.0.s8 %v476
          %v478 = vlaneseq
          %v479 = vshrl.u32 %v478, 7
          %v480 = vsub.s32 %v477, %v479
          %v481 = vrot.slane %v459, %v480
          %v483 = vunpack.c.l.s4 1966171168
          %v484 = vunpack.c.0.s8 %v483
          %v485 = vlaneseq
          %v486 = vshrl.u32 %v485, 7
          %v487 = vsub.s32 %v484, %v486
          %v488 = vrot.slane %v460, %v487
          %v489 = vcombine.high %v467, %v467
          %v490 = vcombine.high %v474, %v474
          %v491 = vcombine.high %v481, %v481
          %v492 = vcombine.high %v488, %v488
          %v493 = vld [vmem:[%s291] sm:$0xff]
          %v494 = vld [vmem:[%s291 + $0x8] sm:$0xff]
          %v495 = vlaneseq
          %v496 = vshrl.u32 %v495, 7
          %v497 = vsub.s32 0, %v496
          %v498 = vrot.slane %v369, %v497
          %v499 = vlaneseq
          %v500 = vshrl.u32 %v499, 7
          %v501 = vsub.s32 0, %v500
          %v502 = vrot.slane %v383, %v501
          %v503 = vlaneseq
          %v504 = vshrl.u32 %v503, 7
          %v505 = vsub.s32 0, %v504
          %v506 = vrot.slane %v391, %v505
          %v507 = vlaneseq
          %v508 = vshrl.u32 %v507, 7
          %v509 = vsub.s32 0, %v508
          %v510 = vrot.slane %v393, %v509
          %v511 = vlaneseq
          %v512 = vshrl.u32 %v511, 7
          %v513 = vsub.s32 0, %v512
          %v514 = vrot.slane %v376, %v513
          %v515 = vlaneseq
          %v516 = vshrl.u32 %v515, 7
          %v517 = vsub.s32 0, %v516
          %v518 = vrot.slane %v390, %v517
          %v519 = vlaneseq
          %v520 = vshrl.u32 %v519, 7
          %v521 = vsub.s32 0, %v520
          %v522 = vrot.slane %v392, %v521
          %v523 = vlaneseq
          %v524 = vshrl.u32 %v523, 7
          %v525 = vsub.s32 0, %v524
          %v526 = vrot.slane %v394, %v525
          %v527 = vlaneseq
          %v528 = vshrl.u32 %v527, 7
          %v529 = vsub.s32 0, %v528
          %v530 = vrot.slane %v418, %v529
          %v531 = vlaneseq
          %v532 = vshrl.u32 %v531, 7
          %v533 = vsub.s32 0, %v532
          %v534 = vrot.slane %v432, %v533
          %v535 = vlaneseq
          %v536 = vshrl.u32 %v535, 7
          %v537 = vsub.s32 0, %v536
          %v538 = vrot.slane %v440, %v537
          %v539 = vlaneseq
          %v540 = vshrl.u32 %v539, 7
          %v541 = vsub.s32 0, %v540
          %v542 = vrot.slane %v442, %v541
          %v543 = vlaneseq
          %v544 = vshrl.u32 %v543, 7
          %v545 = vsub.s32 0, %v544
          %v546 = vrot.slane %v425, %v545
          %v547 = vlaneseq
          %v548 = vshrl.u32 %v547, 7
          %v549 = vsub.s32 0, %v548
          %v550 = vrot.slane %v439, %v549
          %v551 = vlaneseq
          %v552 = vshrl.u32 %v551, 7
          %v553 = vsub.s32 0, %v552
          %v554 = vrot.slane %v441, %v553
          %v555 = vlaneseq
          %v556 = vshrl.u32 %v555, 7
          %v557 = vsub.s32 0, %v556
          %v558 = vrot.slane %v443, %v557
          %v559 = vlaneseq
          %v560 = vshrl.u32 %v559, 7
          %v561 = vsub.s32 0, %v560
          %v562 = vrot.slane %v467, %v561
          %v563 = vlaneseq
          %v564 = vshrl.u32 %v563, 7
          %v565 = vsub.s32 0, %v564
          %v566 = vrot.slane %v481, %v565
          %v567 = vlaneseq
          %v568 = vshrl.u32 %v567, 7
          %v569 = vsub.s32 0, %v568
          %v570 = vrot.slane %v489, %v569
          %v571 = vlaneseq
          %v572 = vshrl.u32 %v571, 7
          %v573 = vsub.s32 0, %v572
          %v574 = vrot.slane %v491, %v573
          %v575 = vlaneseq
          %v576 = vshrl.u32 %v575, 7
          %v577 = vsub.s32 0, %v576
          %v578 = vrot.slane %v474, %v577
          %v579 = vlaneseq
          %v580 = vshrl.u32 %v579, 7
          %v581 = vsub.s32 0, %v580
          %v582 = vrot.slane %v488, %v581
          %v583 = vlaneseq
          %v584 = vshrl.u32 %v583, 7
          %v585 = vsub.s32 0, %v584
          %v586 = vrot.slane %v490, %v585
          %v587 = vlaneseq
          %v588 = vshrl.u32 %v587, 7
          %v589 = vsub.s32 0, %v588
          %v590 = vrot.slane %v492, %v589
          %v615 = vadd.f32 %v498, %v493
          %v616 = vadd.f32 %v498, %v494
          %v617 = vadd.f32 %v502, %v493
          %v618 = vadd.f32 %v502, %v494
          %v619 = vadd.f32 %v506, %v493
          %v620 = vadd.f32 %v506, %v494
          %v621 = vadd.f32 %v510, %v493
          %v622 = vadd.f32 %v510, %v494
          %v623 = vadd.f32 %v514, %v493
          %v624 = vadd.f32 %v514, %v494
          %v625 = vadd.f32 %v518, %v493
          %v626 = vadd.f32 %v518, %v494
          %v627 = vadd.f32 %v522, %v493
          %v628 = vadd.f32 %v522, %v494
          %v629 = vadd.f32 %v526, %v493
          %v630 = vadd.f32 %v526, %v494
          %v631 = vadd.f32 %v530, %v493
          %v632 = vadd.f32 %v530, %v494
          %v633 = vadd.f32 %v534, %v493
          %v634 = vadd.f32 %v534, %v494
          %v635 = vadd.f32 %v538, %v493
          %v636 = vadd.f32 %v538, %v494
          %v637 = vadd.f32 %v542, %v493
          %v638 = vadd.f32 %v542, %v494
          %v639 = vadd.f32 %v546, %v493
          %v640 = vadd.f32 %v546, %v494
          %v641 = vadd.f32 %v550, %v493
          %v642 = vadd.f32 %v550, %v494
          %v643 = vadd.f32 %v554, %v493
          %v644 = vadd.f32 %v554, %v494
          %v645 = vadd.f32 %v558, %v493
          %v646 = vadd.f32 %v558, %v494
          %v647 = vadd.f32 %v562, %v493
          %v648 = vadd.f32 %v562, %v494
          %v649 = vadd.f32 %v566, %v493
          %v650 = vadd.f32 %v566, %v494
          %v651 = vadd.f32 %v570, %v493
          %v652 = vadd.f32 %v570, %v494
          %v653 = vadd.f32 %v574, %v493
          %v654 = vadd.f32 %v574, %v494
          %v655 = vadd.f32 %v578, %v493
          %v656 = vadd.f32 %v578, %v494
          %v657 = vadd.f32 %v582, %v493
          %v658 = vadd.f32 %v582, %v494
          %v659 = vadd.f32 %v586, %v493
          %v660 = vadd.f32 %v586, %v494
          %v661 = vadd.f32 %v590, %v493
          %v662 = vadd.f32 %v590, %v494
          %v663 = vmul.f32 %v615, 0.5
          %v664 = vmul.f32 %v616, 0.5
          %v665 = vmul.f32 %v617, 0.5
          %v666 = vmul.f32 %v618, 0.5
          %v667 = vmul.f32 %v619, 0.5
          %v668 = vmul.f32 %v620, 0.5
          %v669 = vmul.f32 %v621, 0.5
          %v670 = vmul.f32 %v622, 0.5
          %v671 = vmul.f32 %v623, 0.5
          %v672 = vmul.f32 %v624, 0.5
          %v673 = vmul.f32 %v625, 0.5
          %v674 = vmul.f32 %v626, 0.5
          %v675 = vmul.f32 %v627, 0.5
          %v676 = vmul.f32 %v628, 0.5
          %v677 = vmul.f32 %v629, 0.5
          %v678 = vmul.f32 %v630, 0.5
          %v679 = vmul.f32 %v631, 0.5
          %v680 = vmul.f32 %v632, 0.5
          %v681 = vmul.f32 %v633, 0.5
          %v682 = vmul.f32 %v634, 0.5
          %v683 = vmul.f32 %v635, 0.5
          %v684 = vmul.f32 %v636, 0.5
          %v685 = vmul.f32 %v637, 0.5
          %v686 = vmul.f32 %v638, 0.5
          %v687 = vmul.f32 %v639, 0.5
          %v688 = vmul.f32 %v640, 0.5
          %v689 = vmul.f32 %v641, 0.5
          %v690 = vmul.f32 %v642, 0.5
          %v691 = vmul.f32 %v643, 0.5
          %v692 = vmul.f32 %v644, 0.5
          %v693 = vmul.f32 %v645, 0.5
          %v694 = vmul.f32 %v646, 0.5
          %v695 = vmul.f32 %v647, 0.5
          %v696 = vmul.f32 %v648, 0.5
          %v697 = vmul.f32 %v649, 0.5
          %v698 = vmul.f32 %v650, 0.5
          %v699 = vmul.f32 %v651, 0.5
          %v700 = vmul.f32 %v652, 0.5
          %v701 = vmul.f32 %v653, 0.5
          %v702 = vmul.f32 %v654, 0.5
          %v703 = vmul.f32 %v655, 0.5
          %v704 = vmul.f32 %v656, 0.5
          %v705 = vmul.f32 %v657, 0.5
          %v706 = vmul.f32 %v658, 0.5
          %v707 = vmul.f32 %v659, 0.5
          %v708 = vmul.f32 %v660, 0.5
          %v709 = vmul.f32 %v661, 0.5
          %v710 = vmul.f32 %v662, 0.5
          %v711 = vtanh.pop %v663
          %v712 = vtanh.pop %v664
          %v713 = vtanh.pop %v665
          %v714 = vtanh.pop %v666
          %v715 = vtanh.pop %v667
          %v716 = vtanh.pop %v668
          %v717 = vtanh.pop %v669
          %v718 = vtanh.pop %v670
          %v719 = vtanh.pop %v671
          %v720 = vtanh.pop %v672
          %v721 = vtanh.pop %v673
          %v722 = vtanh.pop %v674
          %v723 = vtanh.pop %v675
          %v724 = vtanh.pop %v676
          %v725 = vtanh.pop %v677
          %v726 = vtanh.pop %v678
          %v727 = vtanh.pop %v679
          %v728 = vtanh.pop %v680
          %v729 = vtanh.pop %v681
          %v730 = vtanh.pop %v682
          %v731 = vtanh.pop %v683
          %v732 = vtanh.pop %v684
          %v733 = vtanh.pop %v685
          %v734 = vtanh.pop %v686
          %v735 = vtanh.pop %v687
          %v736 = vtanh.pop %v688
          %v737 = vtanh.pop %v689
          %v738 = vtanh.pop %v690
          %v739 = vtanh.pop %v691
          %v740 = vtanh.pop %v692
          %v741 = vtanh.pop %v693
          %v742 = vtanh.pop %v694
          %v743 = vtanh.pop %v695
          %v744 = vtanh.pop %v696
          %v745 = vtanh.pop %v697
          %v746 = vtanh.pop %v698
          %v747 = vtanh.pop %v699
          %v748 = vtanh.pop %v700
          %v749 = vtanh.pop %v701
          %v750 = vtanh.pop %v702
          %v751 = vtanh.pop %v703
          %v752 = vtanh.pop %v704
          %v753 = vtanh.pop %v705
          %v754 = vtanh.pop %v706
          %v755 = vtanh.pop %v707
          %v756 = vtanh.pop %v708
          %v757 = vtanh.pop %v709
          %v758 = vtanh.pop %v710
          %v759 = vmul.f32 %v711, 0.5
          %v760 = vmul.f32 %v712, 0.5
          %v761 = vmul.f32 %v713, 0.5
          %v762 = vmul.f32 %v714, 0.5
          %v763 = vmul.f32 %v715, 0.5
          %v764 = vmul.f32 %v716, 0.5
          %v765 = vmul.f32 %v717, 0.5
          %v766 = vmul.f32 %v718, 0.5
          %v767 = vmul.f32 %v719, 0.5
          %v768 = vmul.f32 %v720, 0.5
          %v769 = vmul.f32 %v721, 0.5
          %v770 = vmul.f32 %v722, 0.5
          %v771 = vmul.f32 %v723, 0.5
          %v772 = vmul.f32 %v724, 0.5
          %v773 = vmul.f32 %v725, 0.5
          %v774 = vmul.f32 %v726, 0.5
          %v775 = vmul.f32 %v727, 0.5
          %v776 = vmul.f32 %v728, 0.5
          %v777 = vmul.f32 %v729, 0.5
          %v778 = vmul.f32 %v730, 0.5
          %v779 = vmul.f32 %v731, 0.5
          %v780 = vmul.f32 %v732, 0.5
          %v781 = vmul.f32 %v733, 0.5
          %v782 = vmul.f32 %v734, 0.5
          %v783 = vmul.f32 %v735, 0.5
          %v784 = vmul.f32 %v736, 0.5
          %v785 = vmul.f32 %v737, 0.5
          %v786 = vmul.f32 %v738, 0.5
          %v787 = vmul.f32 %v739, 0.5
          %v788 = vmul.f32 %v740, 0.5
          %v789 = vmul.f32 %v741, 0.5
          %v790 = vmul.f32 %v742, 0.5
          %v791 = vmul.f32 %v743, 0.5
          %v792 = vmul.f32 %v744, 0.5
          %v793 = vmul.f32 %v745, 0.5
          %v794 = vmul.f32 %v746, 0.5
          %v795 = vmul.f32 %v747, 0.5
          %v796 = vmul.f32 %v748, 0.5
          %v797 = vmul.f32 %v749, 0.5
          %v798 = vmul.f32 %v750, 0.5
          %v799 = vmul.f32 %v751, 0.5
          %v800 = vmul.f32 %v752, 0.5
          %v801 = vmul.f32 %v753, 0.5
          %v802 = vmul.f32 %v754, 0.5
          %v803 = vmul.f32 %v755, 0.5
          %v804 = vmul.f32 %v756, 0.5
          %v805 = vmul.f32 %v757, 0.5
          %v806 = vmul.f32 %v758, 0.5
          %v807 = vadd.f32 %v759, 0.5
          %v808 = vadd.f32 %v760, 0.5
          %v809 = vadd.f32 %v761, 0.5
          %v810 = vadd.f32 %v762, 0.5
          %v811 = vadd.f32 %v763, 0.5
          %v812 = vadd.f32 %v764, 0.5
          %v813 = vadd.f32 %v765, 0.5
          %v814 = vadd.f32 %v766, 0.5
          %v815 = vadd.f32 %v767, 0.5
          %v816 = vadd.f32 %v768, 0.5
          %v817 = vadd.f32 %v769, 0.5
          %v818 = vadd.f32 %v770, 0.5
          %v819 = vadd.f32 %v771, 0.5
          %v820 = vadd.f32 %v772, 0.5
          %v821 = vadd.f32 %v773, 0.5
          %v822 = vadd.f32 %v774, 0.5
          %v823 = vadd.f32 %v775, 0.5
          %v824 = vadd.f32 %v776, 0.5
          %v825 = vadd.f32 %v777, 0.5
          %v826 = vadd.f32 %v778, 0.5
          %v827 = vadd.f32 %v779, 0.5
          %v828 = vadd.f32 %v780, 0.5
          %v829 = vadd.f32 %v781, 0.5
          %v830 = vadd.f32 %v782, 0.5
          %v831 = vadd.f32 %v783, 0.5
          %v832 = vadd.f32 %v784, 0.5
          %v833 = vadd.f32 %v785, 0.5
          %v834 = vadd.f32 %v786, 0.5
          %v835 = vadd.f32 %v787, 0.5
          %v836 = vadd.f32 %v788, 0.5
          %v837 = vadd.f32 %v789, 0.5
          %v838 = vadd.f32 %v790, 0.5
          %v839 = vadd.f32 %v791, 0.5
          %v840 = vadd.f32 %v792, 0.5
          %v841 = vadd.f32 %v793, 0.5
          %v842 = vadd.f32 %v794, 0.5
          %v843 = vadd.f32 %v795, 0.5
          %v844 = vadd.f32 %v796, 0.5
          %v845 = vadd.f32 %v797, 0.5
          %v846 = vadd.f32 %v798, 0.5
          %v847 = vadd.f32 %v799, 0.5
          %v848 = vadd.f32 %v800, 0.5
          %v849 = vadd.f32 %v801, 0.5
          %v850 = vadd.f32 %v802, 0.5
          %v851 = vadd.f32 %v803, 0.5
          %v852 = vadd.f32 %v804, 0.5
          %v853 = vadd.f32 %v805, 0.5
          %v854 = vadd.f32 %v806, 0.5
          %v855 = vmul.f32 %v615, %v807
          %v856 = vmul.f32 %v616, %v808
          %v857 = vmul.f32 %v617, %v809
          %v858 = vmul.f32 %v618, %v810
          %v859 = vmul.f32 %v619, %v811
          %v860 = vmul.f32 %v620, %v812
          %v861 = vmul.f32 %v621, %v813
          %v862 = vmul.f32 %v622, %v814
          %v863 = vmul.f32 %v623, %v815
          %v864 = vmul.f32 %v624, %v816
          %v865 = vmul.f32 %v625, %v817
          %v866 = vmul.f32 %v626, %v818
          %v867 = vmul.f32 %v627, %v819
          %v868 = vmul.f32 %v628, %v820
          %v869 = vmul.f32 %v629, %v821
          %v870 = vmul.f32 %v630, %v822
          %v871 = vmul.f32 %v631, %v823
          %v872 = vmul.f32 %v632, %v824
          %v873 = vmul.f32 %v633, %v825
          %v874 = vmul.f32 %v634, %v826
          %v875 = vmul.f32 %v635, %v827
          %v876 = vmul.f32 %v636, %v828
          %v877 = vmul.f32 %v637, %v829
          %v878 = vmul.f32 %v638, %v830
          %v879 = vmul.f32 %v639, %v831
          %v880 = vmul.f32 %v640, %v832
          %v881 = vmul.f32 %v641, %v833
          %v882 = vmul.f32 %v642, %v834
          %v883 = vmul.f32 %v643, %v835
          %v884 = vmul.f32 %v644, %v836
          %v885 = vmul.f32 %v645, %v837
          %v886 = vmul.f32 %v646, %v838
          %v887 = vmul.f32 %v647, %v839
          %v888 = vmul.f32 %v648, %v840
          %v889 = vmul.f32 %v649, %v841
          %v890 = vmul.f32 %v650, %v842
          %v891 = vmul.f32 %v651, %v843
          %v892 = vmul.f32 %v652, %v844
          %v893 = vmul.f32 %v653, %v845
          %v894 = vmul.f32 %v654, %v846
          %v895 = vmul.f32 %v655, %v847
          %v896 = vmul.f32 %v656, %v848
          %v897 = vmul.f32 %v657, %v849
          %v898 = vmul.f32 %v658, %v850
          %v899 = vmul.f32 %v659, %v851
          %v900 = vmul.f32 %v660, %v852
          %v901 = vmul.f32 %v661, %v853
          %v902 = vmul.f32 %v662, %v854
          %v903 = vpack.c.bf16 %v856, %v855
          %v904 = vpack.c.bf16 %v858, %v857
          %v905 = vpack.c.bf16 %v860, %v859
          %v906 = vpack.c.bf16 %v862, %v861
          %v907 = vpack.c.bf16 %v864, %v863
          %v908 = vpack.c.bf16 %v866, %v865
          %v909 = vpack.c.bf16 %v868, %v867
          %v910 = vpack.c.bf16 %v870, %v869
          %v911 = vpack.c.bf16 %v872, %v871
          %v912 = vpack.c.bf16 %v874, %v873
          %v913 = vpack.c.bf16 %v876, %v875
          %v914 = vpack.c.bf16 %v878, %v877
          %v915 = vpack.c.bf16 %v880, %v879
          %v916 = vpack.c.bf16 %v882, %v881
          %v917 = vpack.c.bf16 %v884, %v883
          %v918 = vpack.c.bf16 %v886, %v885
          %v919 = vpack.c.bf16 %v888, %v887
          %v920 = vpack.c.bf16 %v890, %v889
          %v921 = vpack.c.bf16 %v892, %v891
          %v922 = vpack.c.bf16 %v894, %v893
          %v923 = vpack.c.bf16 %v896, %v895
          %v924 = vpack.c.bf16 %v898, %v897
          %v925 = vpack.c.bf16 %v900, %v899
          %v926 = vpack.c.bf16 %v902, %v901
          %927 = vst [vmem:[#allocation2] sm:$0xff] %v903
          %928 = vst [vmem:[#allocation2 + $0x8] sm:$0xff] %v904
          %929 = vst [vmem:[#allocation2 + $0x10] sm:$0xff] %v905
          %930 = vst [vmem:[#allocation2 + $0x18] sm:$0xff] %v906
          %931 = vst [vmem:[#allocation2 + $0x20] sm:$0xff] %v907
          %932 = vst [vmem:[#allocation2 + $0x28] sm:$0xff] %v908
          %933 = vst [vmem:[#allocation2 + $0x30] sm:$0xff] %v909
          %934 = vst [vmem:[#allocation2 + $0x38] sm:$0xff] %v910
          %935 = vst [vmem:[#allocation2 + $0x40] sm:$0xff] %v911
          %936 = vst [vmem:[#allocation2 + $0x48] sm:$0xff] %v912
          %937 = vst [vmem:[#allocation2 + $0x50] sm:$0xff] %v913
          %938 = vst [vmem:[#allocation2 + $0x58] sm:$0xff] %v914
          %939 = vst [vmem:[#allocation2 + $0x60] sm:$0xff] %v915
          %940 = vst [vmem:[#allocation2 + $0x68] sm:$0xff] %v916
          %941 = vst [vmem:[#allocation2 + $0x70] sm:$0xff] %v917
          %942 = vst [vmem:[#allocation2 + $0x78] sm:$0xff] %v918
          %943 = vst [vmem:[#allocation2 + $0x80] sm:$0xff] %v919
          %944 = vst [vmem:[#allocation2 + $0x88] sm:$0xff] %v920
          %945 = vst [vmem:[#allocation2 + $0x90] sm:$0xff] %v921
          %946 = vst [vmem:[#allocation2 + $0x98] sm:$0xff] %v922
          %947 = vst [vmem:[#allocation2 + $0xa0] sm:$0xff] %v923
          %948 = vst [vmem:[#allocation2 + $0xa8] sm:$0xff] %v924
          %949 = vst [vmem:[#allocation2 + $0xb0] sm:$0xff] %v925
          %950 = vst [vmem:[#allocation2 + $0xb8] sm:$0xff] %v926
        $region52: #{tpu_custom_call.1} parent=35 // pred_fallthru
          _
        %v951 = vld [vmem:[#allocation2] sm:$0xff]
        %v952 = vld [vmem:[#allocation2 + $0x8] sm:$0xff]
        %v953 = vld [vmem:[#allocation2 + $0x10] sm:$0xff]
        %v954 = vld [vmem:[#allocation2 + $0x18] sm:$0xff]
        %v955 = vld [vmem:[#allocation2 + $0x20] sm:$0xff]
        %v956 = vld [vmem:[#allocation2 + $0x28] sm:$0xff]
        %v957 = vld [vmem:[#allocation2 + $0x30] sm:$0xff]
        %v958 = vld [vmem:[#allocation2 + $0x38] sm:$0xff]
        %v959 = vld [vmem:[#allocation2 + $0x40] sm:$0xff]
        %v960 = vld [vmem:[#allocation2 + $0x48] sm:$0xff]
        %v961 = vld [vmem:[#allocation2 + $0x50] sm:$0xff]
        %v962 = vld [vmem:[#allocation2 + $0x58] sm:$0xff]
        %v963 = vld [vmem:[#allocation2 + $0x60] sm:$0xff]
        %v964 = vld [vmem:[#allocation2 + $0x68] sm:$0xff]
        %v965 = vld [vmem:[#allocation2 + $0x70] sm:$0xff]
        %v966 = vld [vmem:[#allocation2 + $0x78] sm:$0xff]
        %v967 = vld [vmem:[#allocation2 + $0x80] sm:$0xff]
        %v968 = vld [vmem:[#allocation2 + $0x88] sm:$0xff]
        %v969 = vld [vmem:[#allocation2 + $0x90] sm:$0xff]
        %v970 = vld [vmem:[#allocation2 + $0x98] sm:$0xff]
        %v971 = vld [vmem:[#allocation2 + $0xa0] sm:$0xff]
        %v972 = vld [vmem:[#allocation2 + $0xa8] sm:$0xff]
        %v973 = vld [vmem:[#allocation2 + $0xb0] sm:$0xff]
        %v974 = vld [vmem:[#allocation2 + $0xb8] sm:$0xff]
        %v975 = vld [vmem:[#allocation8] sm:$0xf]
        %v976 = vld [vmem:[#allocation8 + $0x4] sm:$0xf]
        %v977 = vld [vmem:[#allocation8 + $0x8] sm:$0xf]
        %v978 = vld [vmem:[#allocation8 + $0xc] sm:$0xf]
        %v979 = vld [vmem:[#allocation8 + $0x10] sm:$0xf]
        %v980 = vld [vmem:[#allocation8 + $0x14] sm:$0xf]
        %v981 = vld [vmem:[#allocation8 + $0x18] sm:$0xf]
        %v982 = vld [vmem:[#allocation8 + $0x1c] sm:$0xf]
        %v983 = vld [vmem:[#allocation8 + $0x20] sm:$0xf]
        %v984 = vld [vmem:[#allocation8 + $0x24] sm:$0xf]
        %v985 = vld [vmem:[#allocation8 + $0x28] sm:$0xf]
        %v986 = vld [vmem:[#allocation8 + $0x2c] sm:$0xf]
        %v987 = vld [vmem:[#allocation8 + $0x30] sm:$0xf]
        %v988 = vld [vmem:[#allocation8 + $0x34] sm:$0xf]
        %v989 = vld [vmem:[#allocation8 + $0x38] sm:$0xf]
        %v990 = vld [vmem:[#allocation8 + $0x3c] sm:$0xf]
        %v991 = vld [vmem:[%s332] sm:$0x1]
        %v993 = vlaneseq
        %v994 = vshrl.u32 %v993, 7
        %v995 = vsub.s32 0, %v994
        %v996 = vrot.slane %v991, %v995
        %v1014 = vunpack.c.l.b16 %v975
        %v1015 = vunpack.c.l.b16 %v976
        %v1016 = vunpack.c.l.b16 %v977
        %v1017 = vunpack.c.l.b16 %v978
        %v1018 = vunpack.c.l.b16 %v979
        %v1019 = vunpack.c.l.b16 %v980
        %v1020 = vunpack.c.l.b16 %v981
        %v1021 = vunpack.c.l.b16 %v982
        %v1022 = vunpack.c.l.b16 %v983
        %v1023 = vunpack.c.l.b16 %v984
        %v1024 = vunpack.c.l.b16 %v985
        %v1025 = vunpack.c.l.b16 %v986
        %v1026 = vunpack.c.l.b16 %v987
        %v1027 = vunpack.c.l.b16 %v988
        %v1028 = vunpack.c.l.b16 %v989
        %v1029 = vunpack.c.l.b16 %v990
        %v1030 = vpack.c.b16 %v1015, %v1014
        %v1031 = vpack.c.b16 %v1017, %v1016
        %v1032 = vpack.c.b16 %v1019, %v1018
        %v1033 = vpack.c.b16 %v1021, %v1020
        %v1034 = vpack.c.b16 %v1023, %v1022
        %v1035 = vpack.c.b16 %v1025, %v1024
        %v1036 = vpack.c.b16 %v1027, %v1026
        %v1037 = vpack.c.b16 %v1029, %v1028
        %1046 = vmatprep.subr.bf16.mxu0 0
        %1047 = vmatpush1.bf16.msra.mxu0 %v1030
        %1048 = vmatprep.subr.bf16.mxu0 0
        %1049 = vmatpush1.bf16.msra.mxu0 %v1031
        %1050 = vmatprep.subr.bf16.mxu0 0
        %1051 = vmatpush1.bf16.msra.mxu0 %v1032
        %1052 = vmatprep.subr.bf16.mxu0 0
        %1053 = vmatpush1.bf16.msra.mxu0 %v1033
        %1054 = vmatprep.subr.bf16.mxu0 0
        %1055 = vmatpush1.bf16.msra.mxu0 %v1034
        %1056 = vmatprep.subr.bf16.mxu0 0
        %1057 = vmatpush1.bf16.msra.mxu0 %v1035
        %1058 = vmatprep.subr.bf16.mxu0 0
        %1059 = vmatpush1.bf16.msra.mxu0 %v1036
        %1060 = vmatprep.subr.bf16.mxu0 0
        %1061 = vmatpush1.bf16.msra.mxu0 %v1037
        %1062 = vmatprep.subr.bf16.mxu0 0
        %1063 = vmatpush1.bf16.msra.mxu0 0
        %1064 = vmatprep.subr.bf16.mxu0 0
        %1065 = vmatpush1.bf16.msra.mxu0 0
        %1066 = vmatprep.subr.bf16.mxu0 0
        %1067 = vmatpush1.bf16.msra.mxu0 0
        %1068 = vmatprep.subr.bf16.mxu0 0
        %1069 = vmatpush1.bf16.msra.mxu0 0
        %1070 = vmatprep.subr.bf16.mxu0 0
        %1071 = vmatpush1.bf16.msra.mxu0 0
        %1072 = vmatprep.subr.bf16.mxu0 0
        %1073 = vmatpush1.bf16.msra.mxu0 0
        %1074 = vmatprep.subr.bf16.mxu0 0
        %1075 = vmatpush1.bf16.msra.mxu0 0
        %1076 = vmatprep.subr.bf16.mxu0 0
        %1077 = vmatpush1.bf16.msra.mxu0 0
        %1078 = vmatprep.mubr.bf16.mxu0 0
        %1079 = vmatmul.mubr.bf16.gmra.mrb[0].mxu0 %v951
        %v1080 = vpop.f32.mrb[0].mxu0
        %v1081 = vadd.f32 %v996, %v1080
        %v1082 = vpop.f32.mrb[0].mxu0
        %v1083 = vpop.f32.mrb[0].mxu0
        %v1084 = vadd.f32 %v996, %v1083
        %v1085 = vpop.f32.mrb[0].mxu0
        %1086 = vmatprep.mubr.bf16.mxu0 0
        %1087 = vmatmul.mubr.bf16.gmra.mrb[0].mxu0 %v952
        %v1088 = vpop.f32.mrb[0].mxu0
        %v1089 = vadd.f32 %v996, %v1088
        %v1090 = vpop.f32.mrb[0].mxu0
        %v1091 = vpop.f32.mrb[0].mxu0
        %v1092 = vadd.f32 %v996, %v1091
        %v1093 = vpop.f32.mrb[0].mxu0
        %1094 = vmatprep.mubr.bf16.mxu0 0
        %1095 = vmatmul.mubr.bf16.gmra.mrb[0].mxu0 %v953
        %v1096 = vpop.f32.mrb[0].mxu0
        %v1097 = vadd.f32 %v996, %v1096
        %v1098 = vpop.f32.mrb[0].mxu0
        %v1099 = vpop.f32.mrb[0].mxu0
        %v1100 = vadd.f32 %v996, %v1099
        %v1101 = vpop.f32.mrb[0].mxu0
        %1102 = vmatprep.mubr.bf16.mxu0 0
        %1103 = vmatmul.mubr.bf16.gmra.mrb[0].mxu0 %v954
        %v1104 = vpop.f32.mrb[0].mxu0
        %v1105 = vadd.f32 %v996, %v1104
        %v1106 = vpop.f32.mrb[0].mxu0
        %v1107 = vpop.f32.mrb[0].mxu0
        %v1108 = vadd.f32 %v996, %v1107
        %v1109 = vpop.f32.mrb[0].mxu0
        %1110 = vmatprep.mubr.bf16.mxu0 0
        %1111 = vmatmul.mubr.bf16.gmra.mrb[0].mxu0 %v955
        %v1112 = vpop.f32.mrb[0].mxu0
        %v1113 = vadd.f32 %v996, %v1112
        %v1114 = vpop.f32.mrb[0].mxu0
        %v1115 = vpop.f32.mrb[0].mxu0
        %v1116 = vadd.f32 %v996, %v1115
        %v1117 = vpop.f32.mrb[0].mxu0
        %1118 = vmatprep.mubr.bf16.mxu0 0
        %1119 = vmatmul.mubr.bf16.gmra.mrb[0].mxu0 %v956
        %v1120 = vpop.f32.mrb[0].mxu0
        %v1121 = vadd.f32 %v996, %v1120
        %v1122 = vpop.f32.mrb[0].mxu0
        %v1123 = vpop.f32.mrb[0].mxu0
        %v1124 = vadd.f32 %v996, %v1123
        %v1125 = vpop.f32.mrb[0].mxu0
        %1126 = vmatprep.mubr.bf16.mxu0 0
        %1127 = vmatmul.mubr.bf16.gmra.mrb[0].mxu0 %v957
        %v1128 = vpop.f32.mrb[0].mxu0
        %v1129 = vadd.f32 %v996, %v1128
        %v1130 = vpop.f32.mrb[0].mxu0
        %v1131 = vpop.f32.mrb[0].mxu0
        %v1132 = vadd.f32 %v996, %v1131
        %v1133 = vpop.f32.mrb[0].mxu0
        %1134 = vmatprep.mubr.bf16.mxu0 0
        %1135 = vmatmul.mubr.bf16.gmra.mrb[0].mxu0 %v958
        %v1136 = vpop.f32.mrb[0].mxu0
        %v1137 = vadd.f32 %v996, %v1136
        %v1138 = vpop.f32.mrb[0].mxu0
        %v1139 = vpop.f32.mrb[0].mxu0
        %v1140 = vadd.f32 %v996, %v1139
        %v1141 = vpop.f32.mrb[0].mxu0
        %1142 = vmatprep.mubr.bf16.mxu0 0
        %1143 = vmatmul.mubr.bf16.gmra.mrb[0].mxu0 %v959
        %v1144 = vpop.f32.mrb[0].mxu0
        %v1145 = vadd.f32 %v996, %v1144
        %v1146 = vpop.f32.mrb[0].mxu0
        %v1147 = vpop.f32.mrb[0].mxu0
        %v1148 = vadd.f32 %v996, %v1147
        %v1149 = vpop.f32.mrb[0].mxu0
        %1150 = vmatprep.mubr.bf16.mxu0 0
        %1151 = vmatmul.mubr.bf16.gmra.mrb[0].mxu0 %v960
        %v1152 = vpop.f32.mrb[0].mxu0
        %v1153 = vadd.f32 %v996, %v1152
        %v1154 = vpop.f32.mrb[0].mxu0
        %v1155 = vpop.f32.mrb[0].mxu0
        %v1156 = vadd.f32 %v996, %v1155
        %v1157 = vpop.f32.mrb[0].mxu0
        %1158 = vmatprep.mubr.bf16.mxu0 0
        %1159 = vmatmul.mubr.bf16.gmra.mrb[0].mxu0 %v961
        %v1160 = vpop.f32.mrb[0].mxu0
        %v1161 = vadd.f32 %v996, %v1160
        %v1162 = vpop.f32.mrb[0].mxu0
        %v1163 = vpop.f32.mrb[0].mxu0
        %v1164 = vadd.f32 %v996, %v1163
        %v1165 = vpop.f32.mrb[0].mxu0
        %1166 = vmatprep.mubr.bf16.mxu0 0
        %1167 = vmatmul.mubr.bf16.gmra.mrb[0].mxu0 %v962
        %v1168 = vpop.f32.mrb[0].mxu0
        %v1169 = vadd.f32 %v996, %v1168
        %v1170 = vpop.f32.mrb[0].mxu0
        %v1171 = vpop.f32.mrb[0].mxu0
        %v1172 = vadd.f32 %v996, %v1171
        %v1173 = vpop.f32.mrb[0].mxu0
        %1174 = vmatprep.mubr.bf16.mxu0 0
        %1175 = vmatmul.mubr.bf16.gmra.mrb[0].mxu0 %v963
        %v1176 = vpop.f32.mrb[0].mxu0
        %v1177 = vadd.f32 %v996, %v1176
        %v1178 = vpop.f32.mrb[0].mxu0
        %v1179 = vpop.f32.mrb[0].mxu0
        %v1180 = vadd.f32 %v996, %v1179
        %v1181 = vpop.f32.mrb[0].mxu0
        %1182 = vmatprep.mubr.bf16.mxu0 0
        %1183 = vmatmul.mubr.bf16.gmra.mrb[0].mxu0 %v964
        %v1184 = vpop.f32.mrb[0].mxu0
        %v1185 = vadd.f32 %v996, %v1184
        %v1186 = vpop.f32.mrb[0].mxu0
        %v1187 = vpop.f32.mrb[0].mxu0
        %v1188 = vadd.f32 %v996, %v1187
        %v1189 = vpop.f32.mrb[0].mxu0
        %1190 = vmatprep.mubr.bf16.mxu0 0
        %1191 = vmatmul.mubr.bf16.gmra.mrb[0].mxu0 %v965
        %v1192 = vpop.f32.mrb[0].mxu0
        %v1193 = vadd.f32 %v996, %v1192
        %v1194 = vpop.f32.mrb[0].mxu0
        %v1195 = vpop.f32.mrb[0].mxu0
        %v1196 = vadd.f32 %v996, %v1195
        %v1197 = vpop.f32.mrb[0].mxu0
        %1198 = vmatprep.mubr.bf16.mxu0 0
        %1199 = vmatmul.mubr.bf16.gmra.mrb[0].mxu0 %v966
        %v1200 = vpop.f32.mrb[0].mxu0
        %v1201 = vadd.f32 %v996, %v1200
        %v1202 = vpop.f32.mrb[0].mxu0
        %v1203 = vpop.f32.mrb[0].mxu0
        %v1204 = vadd.f32 %v996, %v1203
        %v1205 = vpop.f32.mrb[0].mxu0
        %1206 = vmatprep.mubr.bf16.mxu0 0
        %1207 = vmatmul.mubr.bf16.gmra.mrb[0].mxu0 %v967
        %v1208 = vpop.f32.mrb[0].mxu0
        %v1209 = vadd.f32 %v996, %v1208
        %v1210 = vpop.f32.mrb[0].mxu0
        %v1211 = vpop.f32.mrb[0].mxu0
        %v1212 = vadd.f32 %v996, %v1211
        %v1213 = vpop.f32.mrb[0].mxu0
        %1214 = vmatprep.mubr.bf16.mxu0 0
        %1215 = vmatmul.mubr.bf16.gmra.mrb[0].mxu0 %v968
        %v1216 = vpop.f32.mrb[0].mxu0
        %v1217 = vadd.f32 %v996, %v1216
        %v1218 = vpop.f32.mrb[0].mxu0
        %v1219 = vpop.f32.mrb[0].mxu0
        %v1220 = vadd.f32 %v996, %v1219
        %v1221 = vpop.f32.mrb[0].mxu0
        %1222 = vmatprep.mubr.bf16.mxu0 0
        %1223 = vmatmul.mubr.bf16.gmra.mrb[0].mxu0 %v969
        %v1224 = vpop.f32.mrb[0].mxu0
        %v1225 = vadd.f32 %v996, %v1224
        %v1226 = vpop.f32.mrb[0].mxu0
        %v1227 = vpop.f32.mrb[0].mxu0
        %v1228 = vadd.f32 %v996, %v1227
        %v1229 = vpop.f32.mrb[0].mxu0
        %1230 = vmatprep.mubr.bf16.mxu0 0
        %1231 = vmatmul.mubr.bf16.gmra.mrb[0].mxu0 %v970
        %v1232 = vpop.f32.mrb[0].mxu0
        %v1233 = vadd.f32 %v996, %v1232
        %v1234 = vpop.f32.mrb[0].mxu0
        %v1235 = vpop.f32.mrb[0].mxu0
        %v1236 = vadd.f32 %v996, %v1235
        %v1237 = vpop.f32.mrb[0].mxu0
        %1238 = vmatprep.mubr.bf16.mxu0 0
        %1239 = vmatmul.mubr.bf16.gmra.mrb[0].mxu0 %v971
        %v1240 = vpop.f32.mrb[0].mxu0
        %v1241 = vadd.f32 %v996, %v1240
        %v1242 = vpop.f32.mrb[0].mxu0
        %v1243 = vpop.f32.mrb[0].mxu0
        %v1244 = vadd.f32 %v996, %v1243
        %v1245 = vpop.f32.mrb[0].mxu0
        %1246 = vmatprep.mubr.bf16.mxu0 0
        %1247 = vmatmul.mubr.bf16.gmra.mrb[0].mxu0 %v972
        %v1248 = vpop.f32.mrb[0].mxu0
        %v1249 = vadd.f32 %v996, %v1248
        %v1250 = vpop.f32.mrb[0].mxu0
        %v1251 = vpop.f32.mrb[0].mxu0
        %v1252 = vadd.f32 %v996, %v1251
        %v1253 = vpop.f32.mrb[0].mxu0
        %1254 = vmatprep.mubr.bf16.mxu0 0
        %1255 = vmatmul.mubr.bf16.gmra.mrb[0].mxu0 %v973
        %v1256 = vpop.f32.mrb[0].mxu0
        %v1257 = vadd.f32 %v996, %v1256
        %v1258 = vpop.f32.mrb[0].mxu0
        %v1259 = vpop.f32.mrb[0].mxu0
        %v1260 = vadd.f32 %v996, %v1259
        %v1261 = vpop.f32.mrb[0].mxu0
        %1262 = vmatprep.mubr.bf16.mxu0 0
        %1263 = vmatmul.mubr.bf16.gmra.mrb[0].mxu0 %v974
        %v1264 = vpop.f32.mrb[0].mxu0
        %v1265 = vadd.f32 %v996, %v1264
        %v1266 = vpop.f32.mrb[0].mxu0
        %v1267 = vpop.f32.mrb[0].mxu0
        %v1268 = vadd.f32 %v996, %v1267
        %v1269 = vpop.f32.mrb[0].mxu0
        %1270 = vdwg.mxu0
        %1271 = vst [vmem:[%s327] sm:$0xff] %v1081
        %1272 = vst [vmem:[%s327 + $0x8] sm:$0xff] %v1084
        %1273 = vst [vmem:[%s327 + $0x10] sm:$0xff] %v1089
        %1274 = vst [vmem:[%s327 + $0x18] sm:$0xff] %v1092
        %1275 = vst [vmem:[%s327 + $0x20] sm:$0xff] %v1097
        %1276 = vst [vmem:[%s327 + $0x28] sm:$0xff] %v1100
        %1277 = vst [vmem:[%s327 + $0x30] sm:$0xff] %v1105
        %1278 = vst [vmem:[%s327 + $0x38] sm:$0xff] %v1108
        %1279 = vst [vmem:[%s327 + $0x40] sm:$0xff] %v1113
        %1280 = vst [vmem:[%s327 + $0x48] sm:$0xff] %v1116
        %1281 = vst [vmem:[%s327 + $0x50] sm:$0xff] %v1121
        %1282 = vst [vmem:[%s327 + $0x58] sm:$0xff] %v1124
        %1283 = vst [vmem:[%s327 + $0x60] sm:$0xff] %v1129
        %1284 = vst [vmem:[%s327 + $0x68] sm:$0xff] %v1132
        %1285 = vst [vmem:[%s327 + $0x70] sm:$0xff] %v1137
        %1286 = vst [vmem:[%s327 + $0x78] sm:$0xff] %v1140
        %1287 = vst [vmem:[%s327 + $0x80] sm:$0xff] %v1145
        %1288 = vst [vmem:[%s327 + $0x88] sm:$0xff] %v1148
        %1289 = vst [vmem:[%s327 + $0x90] sm:$0xff] %v1153
        %1290 = vst [vmem:[%s327 + $0x98] sm:$0xff] %v1156
        %1291 = vst [vmem:[%s327 + $0xa0] sm:$0xff] %v1161
        %1292 = vst [vmem:[%s327 + $0xa8] sm:$0xff] %v1164
        %1293 = vst [vmem:[%s327 + $0xb0] sm:$0xff] %v1169
        %1294 = vst [vmem:[%s327 + $0xb8] sm:$0xff] %v1172
        %1295 = vst [vmem:[%s327 + $0xc0] sm:$0xff] %v1177
        %1296 = vst [vmem:[%s327 + $0xc8] sm:$0xff] %v1180
        %1297 = vst [vmem:[%s327 + $0xd0] sm:$0xff] %v1185
        %1298 = vst [vmem:[%s327 + $0xd8] sm:$0xff] %v1188
        %1299 = vst [vmem:[%s327 + $0xe0] sm:$0xff] %v1193
        %1300 = vst [vmem:[%s327 + $0xe8] sm:$0xff] %v1196
        %1301 = vst [vmem:[%s327 + $0xf0] sm:$0xff] %v1201
        %1302 = vst [vmem:[%s327 + $0xf8] sm:$0xff] %v1204
        %1303 = vst [vmem:[%s327 + $0x100] sm:$0xff] %v1209
        %1304 = vst [vmem:[%s327 + $0x108] sm:$0xff] %v1212
        %1305 = vst [vmem:[%s327 + $0x110] sm:$0xff] %v1217
        %1306 = vst [vmem:[%s327 + $0x118] sm:$0xff] %v1220
        %1307 = vst [vmem:[%s327 + $0x120] sm:$0xff] %v1225
        %1308 = vst [vmem:[%s327 + $0x128] sm:$0xff] %v1228
        %1309 = vst [vmem:[%s327 + $0x130] sm:$0xff] %v1233
        %1310 = vst [vmem:[%s327 + $0x138] sm:$0xff] %v1236
        %1311 = vst [vmem:[%s327 + $0x140] sm:$0xff] %v1241
        %1312 = vst [vmem:[%s327 + $0x148] sm:$0xff] %v1244
        %1313 = vst [vmem:[%s327 + $0x150] sm:$0xff] %v1249
        %1314 = vst [vmem:[%s327 + $0x158] sm:$0xff] %v1252
        %1315 = vst [vmem:[%s327 + $0x160] sm:$0xff] %v1257
        %1316 = vst [vmem:[%s327 + $0x168] sm:$0xff] %v1260
        %1317 = vst [vmem:[%s327 + $0x170] sm:$0xff] %v1265
        %1318 = vst [vmem:[%s327 + $0x178] sm:$0xff] %v1268
        %s1319 = sand.u32 %s172, 1
        %s1320 = scalar_lea.sflag [#allocation5], %s1319
        %s1321 = sand.u32 %s172, 1
        %s1322 = smul.addr %s1321, 384
        %s1323 = scalar_lea.vmem [#allocation9], %s1322
        // Predicated region
        $region53: #{tpu_custom_call.1} parent=35 // pred_check
          %p1324 = pneg %p182
        $region54: #{tpu_custom_call.1} parent=35 // pred_check_branch
          %1326 = sbr.rel (%p1324) target = $region56
        $region55: #{tpu_custom_call.1} parent=35 // pred_region
          %s1327 = smul.u32 24, %s31
          %s1328 = smul.u32 2, %s32
          %s1330 = ssub.s32 6144, 6144
          %1331 = vsyncadd %s1320, %s1330
          %s1332 = sadd.s32 %s33, %s1328
          %s1333 = smul.addr %s1327, 2
          %s1334 = sadd.s32 %s1332, %s1333
          %s1335 = smul.addr %s30, 48
          %s1336 = sadd.s32 %s1334, %s1335
          %s1337 = smul.addr %s1336, 128
          %s1338 = scalar_lea.hbm %s4, %s1337
          %s1339 = sshll.u32 %s1323, 4
          %s1340 = int_to_ptr.vmem [resolvable:$true] %s1339
          %1345 = dma.vmem_to_hbm [thread:$0]  %s1340, 6144, %s1338, %s1320, 128, 128, 8
        $region56: #{tpu_custom_call.1} parent=35 // pred_fallthru
          _
      $region36: #{tpu_custom_call.1} parent=5 // pred_fallthru
        _
      %p1346 = scmp.le.s32.totalorder 2, %s19
      // Predicated region
      $region57: #{tpu_custom_call.1} parent=5 // pred_check
        %p1347 = pneg %p1346
      $region58: #{tpu_custom_call.1} parent=5 // pred_check_branch
        %1349 = sbr.rel (%p1347) target = $region60
      $region59: #{tpu_custom_call.1} parent=5 // pred_region
        %s1350 = ssub.s32 %s19, 2
        // Predicated region
        $region61: #{tpu_custom_call.1} parent=59 // pred_check
          %p1351 = pneg %p188
        $region62: #{tpu_custom_call.1} parent=59 // pred_check_branch
          %1353 = sbr.rel (%p1351) target = $region64
        $region63: #{tpu_custom_call.1} parent=59 // pred_region
          %s1354 = sand.u32 %s173, 1
          %s1355 = scalar_lea.sflag [#allocation5], %s1354
          %s1356 = sand.u32 %s173, 1
          %s1357 = smul.addr %s1356, 384
          %s1358 = scalar_lea.vmem [#allocation9], %s1357
          %1359 = dma.done %s1355, 6144
        $region64: #{tpu_custom_call.1} parent=59 // pred_fallthru
          _
      $region60: #{tpu_custom_call.1} parent=5 // pred_fallthru
        _
    $region6: #{tpu_custom_call.1} parent=1 // loop_footer
      %s23 = sadd.s32 1, %s19
    $region7: #{tpu_custom_call.1} parent=1 // loop_footer_branch
      %18 = sbr.rel target = $region3
    $region8: #{tpu_custom_call.1} parent=1 // loop_exit
      _
    %1360 = vsyncpa [#allocation4], 1
    %s1361 = scalar_lea.sflag [#allocation4], 1
    %1362 = vsyncpa %s1361, 1
    %1363 = vsyncpa [#allocation7], 1
    %s1364 = scalar_lea.sflag [#allocation7], 1
    %1365 = vsyncpa %s1364, 1
    %1366 = vsyncpa [#allocation5], 1
    %s1367 = scalar_lea.sflag [#allocation5], 1
    %1368 = vsyncpa %s1367, 1

</llo_original>
